<compile_context>
chip_gen: v5e
topology: v5e:2x2
jax: 0.10.0
libtpu: 0.0.40
codegen_flags: <defaults>
</compile_context>

<pallas_src>
import jax
import jax.numpy as jnp
from jax.experimental import pallas as pl
from jax.experimental.pallas import tpu as pltpu

# --- ResampleLoss hyper-parameters (module defaults, reweight_func='rebalance') ---
MAP_ALPHA = 10.0        # map_param['alpha']
MAP_BETA = 0.2          # map_param['beta']
MAP_GAMMA = 0.1         # map_param['gamma']
NEG_SCALE = 5.0         # logit_reg['neg_scale']
INIT_BIAS = 0.1         # logit_reg['init_bias']
FOCAL_GAMMA = 2         # focal['gamma']
BALANCE_PARAM = 2.0     # focal['balance_param']
LOSS_WEIGHT = 1.0
# reduction = 'mean'


def _round_up(x, m):
    return ((x + m - 1) // m) * m


def _make_resample_kernel(n_real, tile_n):
    def kernel(score_ref, label_ref, freq_inv_ref, init_bias_ref, out_ref):
        x = score_ref[...].astype(jnp.float32)       # (T, C) logits
        y = label_ref[...].astype(jnp.float32)       # (T, C) binary labels {0,1}
        freq_inv = freq_inv_ref[...]                 # (1, C)
        init_bias = init_bias_ref[...]               # (1, C)

        # ---- rebalance_weight: sigmoid(beta*(freq_inv/rr - gamma)) + alpha ----
        rr = jnp.sum(y * freq_inv, axis=1, keepdims=True)             # (T, 1)
        inv_rr = pl.reciprocal(jnp.maximum(rr, 1e-12), approx=True)   # EUP slot
        pos_weight = freq_inv * inv_rr                                # (T, C)
        weight = jax.nn.sigmoid(MAP_BETA * pos_weight
                                - (MAP_BETA * MAP_GAMMA)) + MAP_ALPHA

        # ---- logit_reg + BCE sign fold (labels exactly {0,1}) ----
        # scaled = (x+b) * (neg_scale - (neg_scale-1)*y); z = (2y-1)*scaled
        #   == (x + b) * (6y - 5)   for neg_scale = 5
        z = (x + init_bias) * (6.0 * y - 5.0)

        # weight blend (/neg_scale on negatives) with balance_param=2 folded in:
        #   2 * weight * (0.2 + 0.8*y)  ==  weight * (0.4 + 1.6*y)
        wblend = weight * (1.6 * y + 0.4)

        # ---- numerically stable BCE-with-logits + focal ----
        pt = jax.nn.sigmoid(z)                                   # == exp(-bce)
        nz = -z
        bce = jnp.maximum(nz, 0.0) + jnp.log1p(jnp.exp(jnp.minimum(z, nz)))
        one_m_pt = 1.0 - pt
        loss = one_m_pt * one_m_pt * (bce * wblend)

        # ---- mask the ragged batch tail (select: safe against garbage rows) ----
        row = pl.program_id(0) * tile_n + jax.lax.broadcasted_iota(
            jnp.int32, (tile_n, 1), 0)
        loss = jnp.where(row < n_real, loss, 0.0)

        # per-tile partial sum broadcast across a 128-lane output row
        out_ref[...] = jnp.broadcast_to(jnp.sum(loss).reshape(1, 1, 1), (1, 1, 128))

    return kernel


def resample_loss_pallas(cls_score, label, class_freq, neg_class_freq, *, tile_n=256):
    n, c = cls_score.shape
    class_freq = class_freq.astype(jnp.float32)
    neg_class_freq = neg_class_freq.astype(jnp.float32)

    train_num = class_freq[0] + neg_class_freq[0]
    init_bias = (-jnp.log(train_num / class_freq - 1.0)
                 * (INIT_BIAS / NEG_SCALE)).reshape(1, c)
    freq_inv = (1.0 / class_freq).reshape(1, c)

    # --- VMEM budget (generation-aware): inputs double-buffered at native width
    #     + ~3 f32 intermediate tiles; VMEM lane-pads the class axis to 128. ---
    in_bytes = jnp.dtype(cls_score.dtype).itemsize + jnp.dtype(label.dtype).itemsize
    c_vmem = _round_up(c, 128)
    try:
        vmem_cap = int(pltpu.get_tpu_info().vmem_capacity_bytes)
    except Exception:
        vmem_cap = 64 << 20                      # v7x per-TC size; safe everywhere
    budget = min(vmem_cap // 2, 48 << 20)

    def working_set(t):
        return 2 * t * c_vmem * in_bytes + 3 * t * c_vmem * 4

    # --- batch tiling: >= 4 grid steps for pipelining / both v7x TCs,
    #     16-row granularity (bf16 packs 2 rows/sublane). ---
    if n <= 16:
        tile_n = n                               # single full-dim block, no overhang
    else:
        tile_n = min(tile_n, max(16, _round_up(-(-n // 4), 16)))
        tile_n = max(16, (tile_n // 16) * 16)
        while tile_n > 16 and working_set(tile_n) > budget:
            tile_n = max(16, ((tile_n // 2) // 16) * 16)
    # TODO(synk): for very large C (where the budget would force tiny row tiles),
    # a class-axis 'arbitrary' grid with two-pass rr/loss accumulation would keep
    # 128-256 row tiles; single-pass full-C blocks are used here.

    num_tiles = -(-n // tile_n)

    grid_spec = pltpu.PrefetchScalarGridSpec(
        num_scalar_prefetch=0,
        grid=(num_tiles,),
        in_specs=[
            pl.BlockSpec((tile_n, c), lambda i: (i, 0)),   # logits tile (native dtype)
            pl.BlockSpec((tile_n, c), lambda i: (i, 0)),   # labels tile (native dtype)
            pl.BlockSpec((1, c), lambda i: (0, 0)),        # freq_inv (resident)
            pl.BlockSpec((1, c), lambda i: (0, 0)),        # init_bias (resident)
        ],
        out_specs=pl.BlockSpec((1, 1, 128), lambda i: (i, 0, 0)),
    )

    vmem_limit = int(min(max(16 << 20, working_set(tile_n) + (4 << 20)),
                         (vmem_cap * 3) // 4))
    cost = pl.CostEstimate(
        flops=26 * n * c,
        transcendentals=4 * n * c,
        bytes_accessed=int(n * c * in_bytes + 2 * c * 4 + num_tiles * 128 * 4),
    )

    partials = pl.pallas_call(
        _make_resample_kernel(n, tile_n),
        out_shape=jax.ShapeDtypeStruct((num_tiles, 1, 128), jnp.float32),
        grid_spec=grid_spec,
        compiler_params=pltpu.CompilerParams(
            dimension_semantics=("parallel",),
            vmem_limit_bytes=vmem_limit,
        ),
        cost_estimate=cost,
    )(cls_score, label, freq_inv, init_bias)

    return jnp.sum(partials[:, 0, 0]) * (LOSS_WEIGHT / (n * c))


def resample_loss_ref(cls_score, label, class_freq, neg_class_freq):
    """Pure-JAX reference mirroring the PyTorch forward."""
    x = cls_score.astype(jnp.float32)
    y = label.astype(jnp.float32)
    class_freq = class_freq.astype(jnp.float32)
    neg_class_freq = neg_class_freq.astype(jnp.float32)

    train_num = class_freq[0] + neg_class_freq[0]
    init_bias = -jnp.log(train_num / class_freq - 1.0) * INIT_BIAS / NEG_SCALE
    freq_inv = 1.0 / class_freq

    repeat_rate = jnp.sum(y * freq_inv[None, :], axis=1, keepdims=True)
    pos_weight = freq_inv[None, :] / repeat_rate
    weight = jax.nn.sigmoid(MAP_BETA * (pos_weight - MAP_GAMMA)) + MAP_ALPHA

    x = x + init_bias[None, :]
    x = x * (1.0 - y) * NEG_SCALE + x * y
    weight = weight / NEG_SCALE * (1.0 - y) + weight * y

    bce = jnp.maximum(x, 0.0) - x * y + jnp.log1p(jnp.exp(-jnp.abs(x)))
    pt = jnp.exp(-bce)
    loss = BALANCE_PARAM * ((1.0 - pt) ** FOCAL_GAMMA) * (bce * weight)
    return LOSS_WEIGHT * jnp.mean(loss)


if __name__ == "__main__":
    N, C = 8, 16
    key = jax.random.PRNGKey(0)
    k_score, k_label = jax.random.split(key)

    cls_score_f32 = jax.random.normal(k_score, (N, C), dtype=jnp.float32)
    label_f32 = jax.random.bernoulli(k_label, 0.5, (N, C)).astype(jnp.float32)
    # guarantee at least one positive per row (avoids 0/0 in rebalance weight,
    # same requirement as the original multi-label use case)
    no_pos = (jnp.sum(label_f32, axis=1) == 0).astype(jnp.float32)
    label_f32 = label_f32.at[:, 0].set(jnp.maximum(label_f32[:, 0], no_pos))

    # keep inputs narrow (bf16); the kernel casts to f32 on-chip
    cls_score = cls_score_f32.astype(jnp.bfloat16)
    label = label_f32.astype(jnp.bfloat16)      # 0/1 exact in bf16

    # deterministic synthetic class statistics (class_freq[i] < train_num)
    class_freq = jnp.arange(10.0, 10.0 + 5.0 * C, 5.0, dtype=jnp.float32)   # (C,)
    total = 200.0
    neg_class_freq = total - class_freq                                      # (C,)

    loss = resample_loss_pallas(cls_score, label, class_freq, neg_class_freq)
    loss = jax.block_until_ready(loss)

    ref = resample_loss_ref(cls_score, label, class_freq, neg_class_freq)
    assert jnp.allclose(loss, ref, rtol=1e-4, atol=1e-5), (loss, ref)

    print("KERNEL_OK")
</pallas_src>

<mosaic_0001>
module attributes {stable_mosaic.version = 11 : i64} {
  func.func @kernel(%arg0: i32, %arg1: memref<8x16xbf16, #tpu.memory_space<vmem>>, %arg2: memref<8x16xbf16, #tpu.memory_space<vmem>>, %arg3: memref<1x16xf32, #tpu.memory_space<vmem>>, %arg4: memref<1x16xf32, #tpu.memory_space<vmem>>, %arg5: memref<1x1x128xf32, #tpu.memory_space<vmem>>) attributes {dimension_semantics = [#tpu.dimension_semantics<parallel>], iteration_bounds = array<i64: 1>, scalar_prefetch = 0 : i64, scratch_operands = 0 : i64, tpu.core_type = #tpu.core_type<tc>, window_params = [{transform_indices = @transform_0, window_bounds = array<i64: 8, 16>}, {transform_indices = @transform_1, window_bounds = array<i64: 8, 16>}, {pipeline_mode = #tpu.pipeline_mode<synchronous>, transform_indices = @transform_2, window_bounds = array<i64: 1, 16>}, {pipeline_mode = #tpu.pipeline_mode<synchronous>, transform_indices = @transform_3, window_bounds = array<i64: 1, 16>}, {transform_indices = @transform_4, window_bounds = array<i64: 1, 1, 128>}]} {
    %c0 = arith.constant 0 : index
    %c0_0 = arith.constant 0 : index
    %0 = vector.load %arg1[%c0, %c0_0] : memref<8x16xbf16, #tpu.memory_space<vmem>>, vector<8x16xbf16>
    %1 = arith.extf %0 : vector<8x16xbf16> to vector<8x16xf32>
    %c0_1 = arith.constant 0 : index
    %c0_2 = arith.constant 0 : index
    %2 = vector.load %arg2[%c0_1, %c0_2] : memref<8x16xbf16, #tpu.memory_space<vmem>>, vector<8x16xbf16>
    %3 = arith.extf %2 : vector<8x16xbf16> to vector<8x16xf32>
    %c0_3 = arith.constant 0 : index
    %c0_4 = arith.constant 0 : index
    %4 = vector.load %arg3[%c0_3, %c0_4] : memref<1x16xf32, #tpu.memory_space<vmem>>, vector<1x16xf32>
    %c0_5 = arith.constant 0 : index
    %c0_6 = arith.constant 0 : index
    %5 = vector.load %arg4[%c0_5, %c0_6] : memref<1x16xf32, #tpu.memory_space<vmem>>, vector<1x16xf32>
    %6 = vector.broadcast %4 : vector<1x16xf32> to vector<8x16xf32>
    %7 = arith.mulf %3, %6 : vector<8x16xf32>
    %cst = arith.constant dense<0.000000e+00> : vector<8xf32>
    %8 = vector.multi_reduction <add>, %7, %cst [1] : vector<8x16xf32> to vector<8xf32>
    %9 = vector.shape_cast %8 : vector<8xf32> to vector<8x1xf32>
    %cst_7 = arith.constant 9.99999996E-13 : f32
    %10 = vector.broadcast %cst_7 : f32 to vector<8x1xf32>
    %11 = arith.maximumf %9, %10 : vector<8x1xf32>
    %12 = tpu.reciprocal %11 {approx = true} : vector<8x1xf32> -> vector<8x1xf32>
    %13 = vector.broadcast %4 : vector<1x16xf32> to vector<8x16xf32>
    %14 = vector.broadcast %12 : vector<8x1xf32> to vector<8x16xf32>
    %15 = arith.mulf %13, %14 : vector<8x16xf32>
    %cst_8 = arith.constant 2.000000e-01 : f32
    %16 = vector.broadcast %cst_8 : f32 to vector<8x16xf32>
    %17 = arith.mulf %16, %15 : vector<8x16xf32>
    %cst_9 = arith.constant 2.000000e-02 : f32
    %18 = vector.broadcast %cst_9 : f32 to vector<8x16xf32>
    %19 = arith.subf %17, %18 : vector<8x16xf32>
    %20 = arith.negf %19 : vector<8x16xf32>
    %21 = math.exp %20 : vector<8x16xf32>
    %cst_10 = arith.constant 1.000000e+00 : f32
    %22 = vector.broadcast %cst_10 : f32 to vector<8x16xf32>
    %23 = arith.addf %22, %21 : vector<8x16xf32>
    %24 = arith.divf %22, %23 : vector<8x16xf32>
    %cst_11 = arith.constant 1.000000e+01 : f32
    %25 = vector.broadcast %cst_11 : f32 to vector<8x16xf32>
    %26 = arith.addf %24, %25 : vector<8x16xf32>
    %27 = vector.broadcast %5 : vector<1x16xf32> to vector<8x16xf32>
    %28 = arith.addf %1, %27 : vector<8x16xf32>
    %cst_12 = arith.constant 6.000000e+00 : f32
    %29 = vector.broadcast %cst_12 : f32 to vector<8x16xf32>
    %30 = arith.mulf %29, %3 : vector<8x16xf32>
    %cst_13 = arith.constant 5.000000e+00 : f32
    %31 = vector.broadcast %cst_13 : f32 to vector<8x16xf32>
    %32 = arith.subf %30, %31 : vector<8x16xf32>
    %33 = arith.mulf %28, %32 : vector<8x16xf32>
    %cst_14 = arith.constant 1.600000e+00 : f32
    %34 = vector.broadcast %cst_14 : f32 to vector<8x16xf32>
    %35 = arith.mulf %34, %3 : vector<8x16xf32>
    %cst_15 = arith.constant 4.000000e-01 : f32
    %36 = vector.broadcast %cst_15 : f32 to vector<8x16xf32>
    %37 = arith.addf %35, %36 : vector<8x16xf32>
    %38 = arith.mulf %26, %37 : vector<8x16xf32>
    %39 = arith.negf %33 : vector<8x16xf32>
    %40 = math.exp %39 : vector<8x16xf32>
    %cst_16 = arith.constant 1.000000e+00 : f32
    %41 = vector.broadcast %cst_16 : f32 to vector<8x16xf32>
    %42 = arith.addf %41, %40 : vector<8x16xf32>
    %43 = arith.divf %41, %42 : vector<8x16xf32>
    %cst_17 = arith.constant 0.000000e+00 : f32
    %44 = vector.broadcast %cst_17 : f32 to vector<8x16xf32>
    %45 = arith.subf %44, %33 : vector<8x16xf32>
    %cst_18 = arith.constant 0.000000e+00 : f32
    %46 = vector.broadcast %cst_18 : f32 to vector<8x16xf32>
    %47 = arith.maximumf %45, %46 : vector<8x16xf32>
    %48 = arith.minimumf %33, %45 : vector<8x16xf32>
    %49 = math.exp %48 : vector<8x16xf32>
    %50 = math.log1p %49 : vector<8x16xf32>
    %51 = arith.addf %47, %50 : vector<8x16xf32>
    %cst_19 = arith.constant 1.000000e+00 : f32
    %52 = vector.broadcast %cst_19 : f32 to vector<8x16xf32>
    %53 = arith.subf %52, %43 : vector<8x16xf32>
    %54 = arith.mulf %53, %53 : vector<8x16xf32>
    %55 = arith.mulf %51, %38 : vector<8x16xf32>
    %56 = arith.mulf %54, %55 : vector<8x16xf32>
    %c8_i32 = arith.constant 8 : i32
    %57 = arith.muli %arg0, %c8_i32 : i32
    %58 = tpu.iota {dimensions = array<i32: 0>} : vector<8x1xi32>
    %59 = vector.broadcast %57 : i32 to vector<8x1xi32>
    %60 = arith.addi %59, %58 : vector<8x1xi32>
    %c8_i32_20 = arith.constant 8 : i32
    %61 = vector.broadcast %c8_i32_20 : i32 to vector<8x1xi32>
    %62 = arith.cmpi slt, %60, %61 : vector<8x1xi32>
    %cst_21 = arith.constant 0.000000e+00 : f32
    %63 = vector.shape_cast %62 : vector<8x1xi1> to vector<8x1xi1>
    %64 = vector.broadcast %63 : vector<8x1xi1> to vector<8x16xi1>
    %65 = vector.broadcast %cst_21 : f32 to vector<8x16xf32>
    %66 = arith.select %64, %56, %65 : vector<8x16xi1>, vector<8x16xf32>
    %67 = vector.shape_cast %66 : vector<8x16xf32> to vector<1x8x16xf32>
    %cst_22 = arith.constant dense<0.000000e+00> : vector<1xf32>
    %68 = vector.multi_reduction <add>, %67, %cst_22 [1, 2] : vector<1x8x16xf32> to vector<1xf32>
    %69 = vector.shape_cast %68 : vector<1xf32> to vector<1x1x1xf32>
    %70 = vector.extract %69[0, 0, 0] : f32 from vector<1x1x1xf32>
    %71 = vector.broadcast %70 : f32 to vector<1x1x1xf32>
    %72 = vector.shape_cast %71 : vector<1x1x1xf32> to vector<1x1x1xf32>
    %73 = vector.broadcast %72 : vector<1x1x1xf32> to vector<1x1x128xf32>
    %c0_23 = arith.constant 0 : index
    %c0_24 = arith.constant 0 : index
    %c0_25 = arith.constant 0 : index
    %74 = vector.load %arg5[%c0_23, %c0_24, %c0_25] : memref<1x1x128xf32, #tpu.memory_space<vmem>>, vector<1x1x128xf32>
    tpu.vector_store %arg5[%c0_23, %c0_24, %c0_25], %73 {strides = array<i32>} : memref<1x1x128xf32, #tpu.memory_space<vmem>>, vector<1x1x128xf32>,
    return
  }
  func.func @transform_0(%arg0: i32) -> (i32, i32) {
    %c0_i32 = arith.constant 0 : i32
    %c0_i32_0 = arith.constant 0 : i32
    return %arg0, %c0_i32 : i32, i32
  }
  func.func @transform_1(%arg0: i32) -> (i32, i32) {
    %c0_i32 = arith.constant 0 : i32
    %c0_i32_0 = arith.constant 0 : i32
    return %arg0, %c0_i32 : i32, i32
  }
  func.func @transform_2(%arg0: i32) -> (i32, i32) {
    %c0_i32 = arith.constant 0 : i32
    %c0_i32_0 = arith.constant 0 : i32
    %c0_i32_1 = arith.constant 0 : i32
    return %c0_i32, %c0_i32_0 : i32, i32
  }
  func.func @transform_3(%arg0: i32) -> (i32, i32) {
    %c0_i32 = arith.constant 0 : i32
    %c0_i32_0 = arith.constant 0 : i32
    %c0_i32_1 = arith.constant 0 : i32
    return %c0_i32, %c0_i32_0 : i32, i32
  }
  func.func @transform_4(%arg0: i32) -> (i32, i32, i32) {
    %c0_i32 = arith.constant 0 : i32
    %c0_i32_0 = arith.constant 0 : i32
    %c0_i32_1 = arith.constant 0 : i32
    return %arg0, %c0_i32, %c0_i32_0 : i32, i32, i32
  }
}

</mosaic_0001>

<llo_original>
// kernel: tpu_custom_call.1
$region0: #{tpu_custom_call.1}
  #allocation0 [shape = 'u32[]', space=smem, size = 0x4, offset = 0x4, fixed_abs, tag = 'smem constant byte address 0x4 - core index']
  #allocation1 [shape = 'u32[72,128]{1,0:T(1,128)}', space=vmem, size = 0x9000, scoped, tag = 'internal scratch']
  %s0 = inlined_call_operand.hbm [shape: bf16[8,16], index: 0, kind: input, shape index: {}]
  %s1 = inlined_call_operand.hbm [shape: bf16[8,16], index: 1, kind: input, shape index: {}]
  %s2 = inlined_call_operand.vmem [shape: f32[1,16], index: 2, kind: input, shape index: {}]
  %s3 = inlined_call_operand.vmem [shape: f32[1,16], index: 3, kind: input, shape index: {}]
  %s4 = inlined_call_operand.hbm [shape: f32[1,1,128], index: 4, kind: output, shape index: {}]
  %s5 = sld [smem:[#allocation0]]
  $region34: #{tpu_custom_call.1} parent=0
    _
  %s7 = ssub.s32 1, %s5
  %s8 = scalar_select 0, %s7, %s5
  $region1: #{tpu_custom_call.1} parent=0
    #allocation2 [shape = 'u8[2048]{0}', space=vmem, size = 0x800, scoped, tag = 'input window, operand 0, single buffered']
    #allocation3 [shape = 's32[1]{0}', space=sflag, size = 0x4, scoped, tag = 'scoped memory for tpu_custom_call.1']
    #allocation4 [shape = 's32[1]{0}', space=sflag, size = 0x4, scoped, tag = 'scoped memory for tpu_custom_call.1']
    #allocation5 [shape = 'u8[2048]{0}', space=vmem, size = 0x800, scoped, tag = 'input window, operand 1, single buffered']
    #allocation6 [shape = 's32[1]{0}', space=sflag, size = 0x4, scoped, tag = 'scoped memory for tpu_custom_call.1']
    #allocation7 [shape = 'u8[512]{0}', space=vmem, size = 0x400, scoped, tag = 'output window, operand 0, single buffered']
    %9 = vsyncpa [#allocation3], 0
    %10 = vsyncpa [#allocation6], 0
    %11 = vsyncpa [#allocation4], 0
    // Predicated region
    $region2: #{tpu_custom_call.1} parent=1 // pred_check
      _
    $region3: #{tpu_custom_call.1} parent=1 // pred_check_branch
      %13 = sbr.rel (0) target = $region5
    $region4: #{tpu_custom_call.1} parent=1 // pred_region
      %15 = vsyncadd [#allocation3], 0
      %s17 = sshll.u32 %s0, 4
      %s18 = int_to_ptr.hbm [resolvable:$true] %s17
      %s19 = sshll.u32 [#allocation2], 4
      %s20 = int_to_ptr.vmem [resolvable:$true] %s19
      %22 = dma.hbm_to_vmem [thread:$0]  %s18, 64, %s20, [#allocation3]
    $region5: #{tpu_custom_call.1} parent=1 // pred_fallthru
      _
    // Predicated region
    $region6: #{tpu_custom_call.1} parent=1 // pred_check
      _
    $region7: #{tpu_custom_call.1} parent=1 // pred_check_branch
      %24 = sbr.rel (0) target = $region9
    $region8: #{tpu_custom_call.1} parent=1 // pred_region
      %26 = vsyncadd [#allocation6], 0
      %s28 = sshll.u32 %s1, 4
      %s29 = int_to_ptr.hbm [resolvable:$true] %s28
      %s30 = sshll.u32 [#allocation5], 4
      %s31 = int_to_ptr.vmem [resolvable:$true] %s30
      %33 = dma.hbm_to_vmem [thread:$0]  %s29, 64, %s31, [#allocation6]
    $region9: #{tpu_custom_call.1} parent=1 // pred_fallthru
      _
    // Predicated region
    $region10: #{tpu_custom_call.1} parent=1 // pred_check
      _
    $region11: #{tpu_custom_call.1} parent=1 // pred_check_branch
      %35 = sbr.rel (0) target = $region13
    $region12: #{tpu_custom_call.1} parent=1 // pred_region
      _
    $region13: #{tpu_custom_call.1} parent=1 // pred_fallthru
      _
    // Predicated region
    $region14: #{tpu_custom_call.1} parent=1 // pred_check
      _
    $region15: #{tpu_custom_call.1} parent=1 // pred_check_branch
      %37 = sbr.rel (0) target = $region17
    $region16: #{tpu_custom_call.1} parent=1 // pred_region
      _
    $region17: #{tpu_custom_call.1} parent=1 // pred_fallthru
      _
    // Predicated region
    $region18: #{tpu_custom_call.1} parent=1 // pred_check
      _
    $region19: #{tpu_custom_call.1} parent=1 // pred_check_branch
      %39 = sbr.rel (0) target = $region21
    $region20: #{tpu_custom_call.1} parent=1 // pred_region
      %41 = dma.done [#allocation3], 64
    $region21: #{tpu_custom_call.1} parent=1 // pred_fallthru
      _
    // Predicated region
    $region22: #{tpu_custom_call.1} parent=1 // pred_check
      _
    $region23: #{tpu_custom_call.1} parent=1 // pred_check_branch
      %43 = sbr.rel (0) target = $region25
    $region24: #{tpu_custom_call.1} parent=1 // pred_region
      %45 = dma.done [#allocation6], 64
    $region25: #{tpu_custom_call.1} parent=1 // pred_fallthru
      _
    %v46 = vld [vmem:[#allocation2] sm:$0xf]
    %v47 = vunpack.c.l.bf16 %v46
    %v48 = vld [vmem:[#allocation5] sm:$0xf]
    %v49 = vunpack.c.l.bf16 %v48
    %v50 = vld [vmem:[%s2] sm:$0x1]
    %v51 = vld [vmem:[%s3] sm:$0x1]
    %v53 = vperm.slane %v50, 0
    %v55 = vmul.f32 %v49, %v53
    %vm56 = vcmask 130048
    %v57 = vsel %vm56, %v55, 0.0
    %58 = vadd.xlane.f32.xlu0 %v57
    %v59 = vpop.xlane.xlu0 %58
    %v60 = vmax.f32 %v59, 1e-12
    %v61 = vrcp.pop %v60
    %v62 = vmul.f32 %v53, %v61
    %v63 = vmul.f32 %v62, 0.2
    %v64 = vsub.f32 %v63, 0.02
    %v65 = vxor.u32 %v64, 2147483648
    %v66 = vmul.f32 %v65, 1.442695
    %v67 = vpow.pop %v66
    %v68 = vadd.f32 %v67, 1.0
    %v69 = vrcp.pop %v68
    %v70 = vmul.f32 %v68, %v69
    %v71 = vsub.f32 1.0, %v70
    %v72 = vmul.f32 %v69, %v71
    %v73 = vadd.f32 %v69, %v72
    %vm74 = vweird.f32 %v68
    %vm75 = vweird.f32 %v69
    %vm76 = vmor %vm74, %vm75
    %v77 = vsel %vm76, %v69, %v73
    %v78 = vand.u32 2147483647, %v68
    %vm79 = vcmp.eq.f32.partialorder %v78, 8.507059e+37
    %v80 = vand.u32 %v68, 2147483648
    %v81 = vor.u32 1.1754944e-38, %v80
    %v82 = vsel %vm79, %v81, %v77
    %v83 = vmul.f32 1.0, %v82
    %v84 = vadd.f32 %v83, 10.0
    %v86 = vperm.slane %v51, 0
    %v88 = vadd.f32 %v47, %v86
    %v89 = vmul.f32 %v49, 6.0
    %v90 = vsub.f32 %v89, 5.0
    %v91 = vmul.f32 %v88, %v90
    %v92 = vmul.f32 %v49, 1.6
    %v93 = vadd.f32 %v92, 0.4
    %v94 = vmul.f32 %v84, %v93
    %v95 = vxor.u32 %v91, 2147483648
    %v96 = vmul.f32 %v95, 1.442695
    %v97 = vpow.pop %v96
    %v98 = vadd.f32 %v97, 1.0
    %v99 = vrcp.pop %v98
    %v100 = vmul.f32 %v98, %v99
    %v101 = vsub.f32 1.0, %v100
    %v102 = vmul.f32 %v99, %v101
    %v103 = vadd.f32 %v99, %v102
    %vm104 = vweird.f32 %v98
    %vm105 = vweird.f32 %v99
    %vm106 = vmor %vm104, %vm105
    %v107 = vsel %vm106, %v99, %v103
    %v108 = vand.u32 2147483647, %v98
    %vm109 = vcmp.eq.f32.partialorder %v108, 8.507059e+37
    %v110 = vand.u32 %v98, 2147483648
    %v111 = vor.u32 1.1754944e-38, %v110
    %v112 = vsel %vm109, %v111, %v107
    %v113 = vmul.f32 1.0, %v112
    %v114 = vsub.f32 0.0, %v91
    %v115 = vmax.f32 %v114, 0.0
    %v116 = vmin.f32 %v91, %v114
    %v117 = vmul.f32 %v116, 1.442695
    %v118 = vpow.pop %v117
    %v119 = vadd.f32 %v118, 1.0
    %v120 = vlog2.pop %v119
    %v121 = vmul.f32 %v120, 0.6931472
    %v122 = vmul.f32 -0.5, %v118
    %v123 = vadd.f32 %v122, 1.0
    %v124 = vmul.f32 %v123, %v118
    %v125 = vand.u32 2147483647, %v118
    %vm126 = vcmp.lt.f32.partialorder %v125, 0.0004427343
    %v127 = vsel %vm126, %v124, %v121
    %v128 = vadd.f32 %v115, %v127
    %v129 = vsub.f32 1.0, %v113
    %v130 = vmul.f32 %v129, %v129
    %v131 = vmul.f32 %v128, %v94
    %v132 = vmul.f32 %v130, %v131
    %s133 = smul.u32 0, 8
    %v134 = vlaneseq
    %v135 = vshrl.u32 %v134, 7
    %v136 = vstv %s133
    %v137 = vadd.s32 %v136, %v135
    %vm138 = vcmp.lt.s32.totalorder %v137, 8
    %v139 = vsel %vm138, 1, 0
    %vm140 = vcmp.eq.s32.totalorder %v139, 1
    %v141 = vsel %vm140, %v132, 0.0
    %v142 = vsel %vm56, %v141, 0.0
    %143 = vadd.xlane.f32.xlu0 %v142
    %v144 = vpop.xlane.xlu0 %143
    %v145 = vrot.slane %v144, 4
    %v146 = vadd.f32 %v144, %v145
    %v147 = vrot.slane %v146, 2
    %v148 = vadd.f32 %v146, %v147
    %v149 = vrot.slane %v148, 1
    %v150 = vadd.f32 %v148, %v149
    %s151 = vtos %v150
    %v152 = vstv %s151
    %153 = vst [vmem:[#allocation7] sm:$0x1] %v152
    // Predicated region
    $region26: #{tpu_custom_call.1} parent=1 // pred_check
      _
    $region27: #{tpu_custom_call.1} parent=1 // pred_check_branch
      %155 = sbr.rel (0) target = $region29
    $region28: #{tpu_custom_call.1} parent=1 // pred_region
      %157 = vsyncadd [#allocation4], 0
      %s159 = sshll.u32 [#allocation7], 4
      %s160 = int_to_ptr.vmem [resolvable:$true] %s159
      %s161 = sshll.u32 %s4, 4
      %s162 = int_to_ptr.hbm [resolvable:$true] %s161
      %164 = dma.vmem_to_hbm [thread:$0]  %s160, 16, %s162, [#allocation4]
    $region29: #{tpu_custom_call.1} parent=1 // pred_fallthru
      _
    // Predicated region
    $region30: #{tpu_custom_call.1} parent=1 // pred_check
      _
    $region31: #{tpu_custom_call.1} parent=1 // pred_check_branch
      %166 = sbr.rel (0) target = $region33
    $region32: #{tpu_custom_call.1} parent=1 // pred_region
      %168 = dma.done [#allocation4], 16
    $region33: #{tpu_custom_call.1} parent=1 // pred_fallthru
      _
    %169 = vsyncpa [#allocation3], 1
    %170 = vsyncpa [#allocation6], 1
    %171 = vsyncpa [#allocation4], 1

</llo_original>
